<compile_context>
chip_gen: v7x
topology: tpu7x:2x2x1
jax: 0.10.0
libtpu: 0.0.40
codegen_flags: <defaults>
</compile_context>

<pallas_src>
import functools

import jax
import jax.numpy as jnp
from jax.experimental import pallas as pl
from jax.experimental.pallas import tpu as pltpu

LANE = 128
SUBLANE = 8
TB_MAX = 512   # batch-tile rows; halve if targeting v7x's 64 MiB VMEM with large H


def _round_up(x, m):
    return (x + m - 1) // m * m


def aff_kernel(x_ref, w_ref, b_ref, out_ref, *, hp):
    """One batch tile: fused matmul -> [p0 | p1 | att_logits], log-softmax, fuse."""
    # Single MXU push: (TB, Dsum) @ (Dsum, 3*Hp), bf16 operands, f32 accumulation.
    y = jnp.dot(x_ref[...], w_ref[...], preferred_element_type=jnp.float32)
    y = y + b_ref[...]                           # single fused bias add (f32)

    p0 = y[:, 0 * hp:1 * hp]        # (TB, Hp) projection of modality 0 (pad cols = 0)
    p1 = y[:, 1 * hp:2 * hp]        # (TB, Hp) projection of modality 1 (pad cols = 0)
    logits = y[:, 2 * hp:3 * hp]    # (TB, Hp) attention logits (pad cols = -inf)

    # Numerically stable log-softmax over the hidden dim (f32 epilogue).
    m = jnp.max(logits, axis=-1, keepdims=True)
    shifted = logits - m                                        # pad cols -> -inf
    lse = jnp.log(jnp.sum(jnp.exp(shifted), axis=-1, keepdims=True))
    log_w = shifted - lse

    # Modality i is weighted by column i of the log-softmax (per-sample scalar).
    w0 = log_w[:, 0:1]
    w1 = log_w[:, 1:2]

    out_ref[...] = p0 * w0 + p1 * w1


def init_params(key, input_dims, hidden_dim):
    """PyTorch nn.Linear-style init; weights stored transposed as (D_in, H)."""
    D0, D1 = input_dims
    Dsum = D0 + D1
    ks = jax.random.split(key, 6)

    def lin(kw, kb, fan_in, shape_w, shape_b):
        bound = 1.0 / jnp.sqrt(fan_in)
        w = jax.random.uniform(kw, shape_w, jnp.float32, -bound, bound)
        b = jax.random.uniform(kb, shape_b, jnp.float32, -bound, bound)
        return w, b

    wp0, bp0 = lin(ks[0], ks[1], D0, (D0, hidden_dim), (hidden_dim,))
    wp1, bp1 = lin(ks[2], ks[3], D1, (D1, hidden_dim), (hidden_dim,))
    wa, ba = lin(ks[4], ks[5], Dsum, (Dsum, hidden_dim), (hidden_dim,))
    return {
        "wp0": wp0, "bp0": bp0,
        "wp1": wp1, "bp1": bp1,
        "wa0": wa[:D0, :], "wa1": wa[D0:, :], "ba": ba,
    }


def fuse_params(params, compute_dtype=jnp.bfloat16):
    """Build the fused, lane-padded weight/bias consumed by the kernel.

    W_cat (Dsum, 3*Hp) = [[wp0, 0, wa0],
                          [0, wp1, wa1]]   (padded H columns are zero)
    b_cat (1, 3*Hp)    = [bp0 | bp1 | ba]  (padded att-bias columns are -inf so
                                            log-softmax ignores them exactly).
    """
    wp0, wp1 = params["wp0"], params["wp1"]
    wa0, wa1 = params["wa0"], params["wa1"]
    D0, H = wp0.shape
    D1 = wp1.shape[0]
    Dsum = D0 + D1
    Hp = _round_up(H, LANE)

    w_cat = jnp.zeros((Dsum, 3 * Hp), jnp.float32)
    w_cat = w_cat.at[:D0, 0:H].set(wp0)
    w_cat = w_cat.at[D0:, Hp:Hp + H].set(wp1)
    w_cat = w_cat.at[:D0, 2 * Hp:2 * Hp + H].set(wa0)
    w_cat = w_cat.at[D0:, 2 * Hp:2 * Hp + H].set(wa1)

    b_cat = jnp.zeros((1, 3 * Hp), jnp.float32)
    b_cat = b_cat.at[0, 0:H].set(params["bp0"])
    b_cat = b_cat.at[0, Hp:Hp + H].set(params["bp1"])
    b_cat = b_cat.at[0, 2 * Hp:3 * Hp].set(jnp.float32(-jnp.inf))   # pad logits
    b_cat = b_cat.at[0, 2 * Hp:2 * Hp + H].set(params["ba"])

    return w_cat.astype(compute_dtype), b_cat, Hp, H


def aff_forward(x0, x1, params, *, compute_dtype=jnp.bfloat16, tb_max=TB_MAX):
    """AFF forward. x0: (B, D0), x1: (B, D1). Returns (B, H) float32."""
    B = x0.shape[0]
    w_cat, b_cat, Hp, H = fuse_params(params, compute_dtype)
    Dsum = w_cat.shape[0]

    # Concat modalities once; the att Linear over the concat then fuses with
    # both projections into a single matmul.
    x = jnp.concatenate([x0, x1], axis=-1).astype(compute_dtype)

    # Batch tiling: pad B up to a multiple of the tile, slice off afterwards.
    TB = min(tb_max, _round_up(B, SUBLANE))
    Bp = _round_up(B, TB)
    if Bp != B:
        x = jnp.pad(x, ((0, Bp - B), (0, 0)))

    kernel = functools.partial(aff_kernel, hp=Hp)

    out = pl.pallas_call(
        kernel,
        out_shape=jax.ShapeDtypeStruct((Bp, Hp), jnp.float32),
        grid=(Bp // TB,),
        in_specs=[
            pl.BlockSpec((TB, Dsum), lambda i: (i, 0)),       # activations: tiled over batch
            pl.BlockSpec((Dsum, 3 * Hp), lambda i: (0, 0)),   # fused weight: stays resident
            pl.BlockSpec((1, 3 * Hp), lambda i: (0, 0)),      # fused bias:   stays resident
        ],
        out_specs=pl.BlockSpec((TB, Hp), lambda i: (i, 0)),   # lane-dense (Hp % 128 == 0)
        compiler_params=pltpu.CompilerParams(
            dimension_semantics=("parallel",),  # shard batch tiles across TCs (v7x)
        ),
    )(x, w_cat, b_cat)

    return out[:B, :H]


def aff_reference(x0, x1, params, *, compute_dtype=jnp.bfloat16):
    """Pure-JAX reference of the intended PyTorch forward, same operand rounding."""
    c = lambda a: a.astype(compute_dtype).astype(jnp.float32)
    p0 = c(x0) @ c(params["wp0"]) + params["bp0"]
    p1 = c(x1) @ c(params["wp1"]) + params["bp1"]
    logits = c(x0) @ c(params["wa0"]) + c(x1) @ c(params["wa1"]) + params["ba"]
    logw = jax.nn.log_softmax(logits, axis=-1)
    return p0 * logw[:, 0:1] + p1 * logw[:, 1:2]


if __name__ == "__main__":
    B, D0, D1, H = 8, 16, 24, 32
    key = jax.random.PRNGKey(0)
    k_x0, k_x1, k_p = jax.random.split(key, 3)

    x0 = jax.random.normal(k_x0, (B, D0), jnp.float32)
    x1 = jax.random.normal(k_x1, (B, D1), jnp.float32)
    params = init_params(k_p, (D0, D1), H)

    out = aff_forward(x0, x1, params)
    out = jax.block_until_ready(out)

    ref = aff_reference(x0, x1, params)
    assert out.shape == (B, H) and out.dtype == jnp.float32
    assert bool(jnp.isfinite(out).all()), "non-finite values in output"
    assert jnp.allclose(out, ref, atol=1e-4, rtol=1e-4), "mismatch vs reference"

    print("KERNEL_OK")
</pallas_src>

<mosaic_0001>
module attributes {stable_mosaic.version = 11 : i64} {
  func.func @aff_kernel(%arg0: i32, %arg1: memref<8x40xbf16, #tpu.memory_space<vmem>>, %arg2: memref<40x384xbf16, #tpu.memory_space<vmem>>, %arg3: memref<1x384xf32, #tpu.memory_space<vmem>>, %arg4: memref<8x128xf32, #tpu.memory_space<vmem>>) attributes {dimension_semantics = [#tpu.dimension_semantics<parallel>], iteration_bounds = array<i64: 1>, scalar_prefetch = 0 : i64, scratch_operands = 0 : i64, tpu.core_type = #tpu.core_type<tc>, window_params = [{transform_indices = @transform_0, window_bounds = array<i64: 8, 40>}, {pipeline_mode = #tpu.pipeline_mode<synchronous>, transform_indices = @transform_1, window_bounds = array<i64: 40, 384>}, {pipeline_mode = #tpu.pipeline_mode<synchronous>, transform_indices = @transform_2, window_bounds = array<i64: 1, 384>}, {transform_indices = @transform_3, window_bounds = array<i64: 8, 128>}]} {
    %c0 = arith.constant 0 : index
    %c0_0 = arith.constant 0 : index
    %0 = vector.load %arg1[%c0, %c0_0] : memref<8x40xbf16, #tpu.memory_space<vmem>>, vector<8x40xbf16>
    %c0_1 = arith.constant 0 : index
    %c0_2 = arith.constant 0 : index
    %1 = vector.load %arg2[%c0_1, %c0_2] : memref<40x384xbf16, #tpu.memory_space<vmem>>, vector<40x384xbf16>
    %cst = arith.constant dense<0.000000e+00> : vector<8x384xf32>
    %2 = tpu.matmul %0, %1, %cst {dimension_numbers = #tpu.dot_dimension_numbers<[1], [0], [0], [1], [0, 0, 1, 1], [], []>} : vector<8x40xbf16>, vector<40x384xbf16>, vector<8x384xf32> -> vector<8x384xf32>
    %c0_3 = arith.constant 0 : index
    %c0_4 = arith.constant 0 : index
    %3 = vector.load %arg3[%c0_3, %c0_4] : memref<1x384xf32, #tpu.memory_space<vmem>>, vector<1x384xf32>
    %4 = vector.broadcast %3 : vector<1x384xf32> to vector<8x384xf32>
    %5 = arith.addf %2, %4 : vector<8x384xf32>
    %6 = vector.extract_strided_slice %5 {offsets = [0, 0], sizes = [8, 128], strides = [1, 1]} : vector<8x384xf32> to vector<8x128xf32>
    %7 = vector.extract_strided_slice %5 {offsets = [0, 128], sizes = [8, 128], strides = [1, 1]} : vector<8x384xf32> to vector<8x128xf32>
    %8 = vector.extract_strided_slice %5 {offsets = [0, 256], sizes = [8, 128], strides = [1, 1]} : vector<8x384xf32> to vector<8x128xf32>
    %cst_5 = arith.constant dense<0xFF800000> : vector<8xf32>
    %9 = vector.multi_reduction <maximumf>, %8, %cst_5 [1] : vector<8x128xf32> to vector<8xf32>
    %10 = vector.shape_cast %9 : vector<8xf32> to vector<8x1xf32>
    %11 = vector.broadcast %10 : vector<8x1xf32> to vector<8x128xf32>
    %12 = arith.subf %8, %11 : vector<8x128xf32>
    %13 = math.exp %12 : vector<8x128xf32>
    %cst_6 = arith.constant dense<0.000000e+00> : vector<8xf32>
    %14 = vector.multi_reduction <add>, %13, %cst_6 [1] : vector<8x128xf32> to vector<8xf32>
    %15 = vector.shape_cast %14 : vector<8xf32> to vector<8x1xf32>
    %16 = math.log %15 : vector<8x1xf32>
    %17 = vector.broadcast %16 : vector<8x1xf32> to vector<8x128xf32>
    %18 = arith.subf %12, %17 : vector<8x128xf32>
    %19 = vector.extract_strided_slice %18 {offsets = [0, 0], sizes = [8, 1], strides = [1, 1]} : vector<8x128xf32> to vector<8x1xf32>
    %20 = vector.extract_strided_slice %18 {offsets = [0, 1], sizes = [8, 1], strides = [1, 1]} : vector<8x128xf32> to vector<8x1xf32>
    %21 = vector.broadcast %19 : vector<8x1xf32> to vector<8x128xf32>
    %22 = arith.mulf %6, %21 : vector<8x128xf32>
    %23 = vector.broadcast %20 : vector<8x1xf32> to vector<8x128xf32>
    %24 = arith.mulf %7, %23 : vector<8x128xf32>
    %25 = arith.addf %22, %24 : vector<8x128xf32>
    %c0_7 = arith.constant 0 : index
    %c0_8 = arith.constant 0 : index
    %26 = vector.load %arg4[%c0_7, %c0_8] : memref<8x128xf32, #tpu.memory_space<vmem>>, vector<8x128xf32>
    tpu.vector_store %arg4[%c0_7, %c0_8], %25 {strides = array<i32>} : memref<8x128xf32, #tpu.memory_space<vmem>>, vector<8x128xf32>,
    return
  }
  func.func @transform_0(%arg0: i32) -> (i32, i32) {
    %c0_i32 = arith.constant 0 : i32
    %c0_i32_0 = arith.constant 0 : i32
    return %arg0, %c0_i32 : i32, i32
  }
  func.func @transform_1(%arg0: i32) -> (i32, i32) {
    %c0_i32 = arith.constant 0 : i32
    %c0_i32_0 = arith.constant 0 : i32
    %c0_i32_1 = arith.constant 0 : i32
    return %c0_i32, %c0_i32_0 : i32, i32
  }
  func.func @transform_2(%arg0: i32) -> (i32, i32) {
    %c0_i32 = arith.constant 0 : i32
    %c0_i32_0 = arith.constant 0 : i32
    %c0_i32_1 = arith.constant 0 : i32
    return %c0_i32, %c0_i32_0 : i32, i32
  }
  func.func @transform_3(%arg0: i32) -> (i32, i32) {
    %c0_i32 = arith.constant 0 : i32
    %c0_i32_0 = arith.constant 0 : i32
    return %arg0, %c0_i32 : i32, i32
  }
}

</mosaic_0001>

<llo_original>
// kernel: tpu_custom_call.1
$region0: #{tpu_custom_call.1}
  #allocation0 [shape = 'u32[]', space=smem, size = 0x4, offset = 0x4, fixed_abs, tag = 'smem constant byte address 0x4 - core index']
  #allocation1 [shape = 'u32[144,128]{1,0:T(1,128)}', space=vmem, size = 0x12000, scoped, tag = 'internal scratch']
  %s0 = inlined_call_operand.hbm [shape: bf16[8,40], index: 0, kind: input, shape index: {}]
  %s1 = inlined_call_operand.hbm [shape: bf16[40,384], index: 1, kind: input, shape index: {}]
  %s2 = inlined_call_operand.vmem [shape: f32[1,384], index: 2, kind: input, shape index: {}]
  %s3 = inlined_call_operand.hbm [shape: f32[8,128], index: 3, kind: output, shape index: {}]
  %s4 = sld [smem:[#allocation0]]
  $region30: #{tpu_custom_call.1} parent=0
    _
  %s6 = ssub.s32 1, %s4
  %s7 = scalar_select 0, %s6, %s4
  $region1: #{tpu_custom_call.1} parent=0
    #allocation2 [shape = 'u8[2048]{0}', space=vmem, size = 0x800, scoped, tag = 'input window, operand 0, single buffered']
    #allocation3 [shape = 's32[1]{0}', space=sflag, size = 0x4, scoped, tag = 'scoped memory for tpu_custom_call.1']
    #allocation4 [shape = 's32[1]{0}', space=sflag, size = 0x4, scoped, tag = 'scoped memory for tpu_custom_call.1']
    #allocation5 [shape = 'u8[30720]{0}', space=vmem, size = 0x7800, scoped, tag = 'input window, operand 1, single buffered']
    #allocation6 [shape = 's32[1]{0}', space=sflag, size = 0x4, scoped, tag = 'scoped memory for tpu_custom_call.1']
    #allocation7 [shape = 'u8[4096]{0}', space=vmem, size = 0x1000, scoped, tag = 'output window, operand 0, single buffered']
    %8 = vsyncpa [#allocation3], 0
    %9 = vsyncpa [#allocation6], 0
    %10 = vsyncpa [#allocation4], 0
    // Predicated region
    $region2: #{tpu_custom_call.1} parent=1 // pred_check
      _
    $region3: #{tpu_custom_call.1} parent=1 // pred_check_branch
      %12 = sbr.rel (0) target = $region5
    $region4: #{tpu_custom_call.1} parent=1 // pred_region
      %s14 = ssub.s32 64, 64
      %15 = vsyncadd [#allocation3], %s14
      %s17 = sshll.u32 [#allocation2], 4
      %s18 = int_to_ptr.vmem [resolvable:$true] %s17
      %20 = dma.hbm_to_vmem [thread:$0]  %s0, 64, %s18, [#allocation3]
    $region5: #{tpu_custom_call.1} parent=1 // pred_fallthru
      _
    // Predicated region
    $region6: #{tpu_custom_call.1} parent=1 // pred_check
      _
    $region7: #{tpu_custom_call.1} parent=1 // pred_check_branch
      %22 = sbr.rel (0) target = $region9
    $region8: #{tpu_custom_call.1} parent=1 // pred_region
      %s24 = ssub.s32 960, 960
      %25 = vsyncadd [#allocation6], %s24
      %s26 = sshll.u32 [#allocation5], 4
      %s27 = int_to_ptr.vmem [resolvable:$true] %s26
      %32 = dma.hbm_to_vmem [thread:$0]  %s1, 960, %s27, [#allocation6], 192, 192, 12
    $region9: #{tpu_custom_call.1} parent=1 // pred_fallthru
      _
    // Predicated region
    $region10: #{tpu_custom_call.1} parent=1 // pred_check
      _
    $region11: #{tpu_custom_call.1} parent=1 // pred_check_branch
      %34 = sbr.rel (0) target = $region13
    $region12: #{tpu_custom_call.1} parent=1 // pred_region
      _
    $region13: #{tpu_custom_call.1} parent=1 // pred_fallthru
      _
    // Predicated region
    $region14: #{tpu_custom_call.1} parent=1 // pred_check
      _
    $region15: #{tpu_custom_call.1} parent=1 // pred_check_branch
      %36 = sbr.rel (0) target = $region17
    $region16: #{tpu_custom_call.1} parent=1 // pred_region
      %37 = dma.done [#allocation3], 64
    $region17: #{tpu_custom_call.1} parent=1 // pred_fallthru
      _
    // Predicated region
    $region18: #{tpu_custom_call.1} parent=1 // pred_check
      _
    $region19: #{tpu_custom_call.1} parent=1 // pred_check_branch
      %39 = sbr.rel (0) target = $region21
    $region20: #{tpu_custom_call.1} parent=1 // pred_region
      %40 = dma.done [#allocation6], 960
    $region21: #{tpu_custom_call.1} parent=1 // pred_fallthru
      _
    %v42 = vld [vmem:[#allocation2] sm:$0xf]
    %v43 = vld [vmem:[#allocation5] sm:$0xff]
    %v44 = vld [vmem:[#allocation5 + $0x8] sm:$0xf]
    %v45 = vld [vmem:[#allocation5 + $0xc] sm:$0xff]
    %v46 = vld [vmem:[#allocation5 + $0x14] sm:$0xf]
    %v47 = vld [vmem:[#allocation5 + $0x18] sm:$0xff]
    %v48 = vld [vmem:[#allocation5 + $0x20] sm:$0xf]
    %v49 = vld [vmem:[#allocation5 + $0x24] sm:$0xff]
    %v50 = vld [vmem:[#allocation5 + $0x2c] sm:$0xf]
    %v51 = vld [vmem:[#allocation5 + $0x30] sm:$0xff]
    %v52 = vld [vmem:[#allocation5 + $0x38] sm:$0xf]
    %v53 = vld [vmem:[%s2] sm:$0x7]
    %v55 = vlaneseq
    %v56 = vshrl.u32 %v55, 7
    %v57 = vsub.s32 0, %v56
    %v58 = vrot.slane %v53, %v57
    %v59 = vlaneseq
    %v60 = vshrl.u32 %v59, 7
    %v61 = vsub.s32 1, %v60
    %v62 = vrot.slane %v53, %v61
    %v63 = vlaneseq
    %v64 = vshrl.u32 %v63, 7
    %v65 = vsub.s32 2, %v64
    %v66 = vrot.slane %v53, %v65
    %v80 = vunpack.c.l.b16 %v43
    %v81 = vunpack.c.h.b16 %v43
    %v82 = vunpack.c.l.b16 %v44
    %v83 = vunpack.c.l.b16 %v45
    %v84 = vunpack.c.h.b16 %v45
    %v85 = vunpack.c.l.b16 %v46
    %v86 = vunpack.c.l.b16 %v47
    %v87 = vunpack.c.h.b16 %v47
    %v88 = vunpack.c.l.b16 %v48
    %v89 = vunpack.c.l.b16 %v49
    %v90 = vunpack.c.h.b16 %v49
    %v91 = vunpack.c.l.b16 %v50
    %v92 = vunpack.c.l.b16 %v51
    %v93 = vunpack.c.h.b16 %v51
    %v94 = vunpack.c.l.b16 %v52
    %v95 = vpack.c.b16 %v83, %v80
    %v96 = vpack.c.b16 %v84, %v81
    %v97 = vpack.c.b16 %v85, %v82
    %v98 = vpack.c.b16 %v89, %v86
    %v99 = vpack.c.b16 %v90, %v87
    %v100 = vpack.c.b16 %v91, %v88
    %v101 = vpack.c.b16 %v92, %v92
    %v102 = vpack.c.b16 %v93, %v93
    %v103 = vpack.c.b16 %v94, %v94
    %vm110 = vcmask 326656
    %v112 = vsel %vm110, %v42, 0
    %vm114 = vcmask 1043456
    %v116 = vsel %vm114, %v101, 0
    %v119 = vsel %vm114, %v102, 0
    %v122 = vsel %vm114, %v103, 0
    %124 = vmatprep.subr.bf16.mxu0 %v96
    %125 = vmatpush1.bf16.msra.mxu0 %v95
    %126 = vmatprep.subr.bf16.mxu0 %v99
    %127 = vmatpush1.bf16.msra.mxu0 %v98
    %128 = vmatprep.subr.bf16.mxu0 %v119
    %129 = vmatpush1.bf16.msra.mxu0 %v116
    %130 = vmatprep.subr.bf16.mxu0 0
    %131 = vmatpush1.bf16.msra.mxu0 0
    %132 = vmatprep.subr.bf16.mxu0 0
    %133 = vmatpush1.bf16.msra.mxu0 0
    %134 = vmatprep.subr.bf16.mxu0 0
    %135 = vmatpush1.bf16.msra.mxu0 0
    %136 = vmatprep.subr.bf16.mxu0 0
    %137 = vmatpush1.bf16.msra.mxu0 0
    %138 = vmatprep.subr.bf16.mxu0 0
    %139 = vmatpush1.bf16.msra.mxu0 0
    %140 = vmatprep.subr.bf16.mxu0 0
    %141 = vmatpush1.bf16.msra.mxu0 0
    %142 = vmatprep.subr.bf16.mxu0 0
    %143 = vmatpush1.bf16.msra.mxu0 0
    %144 = vmatprep.subr.bf16.mxu0 0
    %145 = vmatpush1.bf16.msra.mxu0 0
    %146 = vmatprep.subr.bf16.mxu0 0
    %147 = vmatpush1.bf16.msra.mxu0 0
    %148 = vmatprep.subr.bf16.mxu0 0
    %149 = vmatpush1.bf16.msra.mxu0 0
    %150 = vmatprep.subr.bf16.mxu0 0
    %151 = vmatpush1.bf16.msra.mxu0 0
    %152 = vmatprep.subr.bf16.mxu0 0
    %153 = vmatpush1.bf16.msra.mxu0 0
    %154 = vmatprep.subr.bf16.mxu0 0
    %155 = vmatpush1.bf16.msra.mxu0 0
    %156 = vmatprep.mubr.bf16.mxu0 0
    %157 = vmatmul.mubr.bf16.gmra.mrb[0].mxu0 %v112
    %v158 = vpop.f32.mrb[0].mxu0
    %v159 = vadd.f32 %v58, %v158
    %v160 = vpop.f32.mrb[0].mxu0
    %v161 = vadd.f32 %v62, %v160
    %v162 = vpop.f32.mrb[0].mxu0
    %v163 = vpop.f32.mrb[0].mxu0
    %164 = vdwg.mxu0
    %165 = vmatprep.subr.bf16.mxu0 0
    %166 = vmatpush1.bf16.msra.mxu0 %v97
    %167 = vmatprep.subr.bf16.mxu0 0
    %168 = vmatpush1.bf16.msra.mxu0 %v100
    %169 = vmatprep.subr.bf16.mxu0 0
    %170 = vmatpush1.bf16.msra.mxu0 %v122
    %171 = vmatprep.subr.bf16.mxu0 0
    %172 = vmatpush1.bf16.msra.mxu0 0
    %173 = vmatprep.subr.bf16.mxu0 0
    %174 = vmatpush1.bf16.msra.mxu0 0
    %175 = vmatprep.subr.bf16.mxu0 0
    %176 = vmatpush1.bf16.msra.mxu0 0
    %177 = vmatprep.subr.bf16.mxu0 0
    %178 = vmatpush1.bf16.msra.mxu0 0
    %179 = vmatprep.subr.bf16.mxu0 0
    %180 = vmatpush1.bf16.msra.mxu0 0
    %181 = vmatprep.subr.bf16.mxu0 0
    %182 = vmatpush1.bf16.msra.mxu0 0
    %183 = vmatprep.subr.bf16.mxu0 0
    %184 = vmatpush1.bf16.msra.mxu0 0
    %185 = vmatprep.subr.bf16.mxu0 0
    %186 = vmatpush1.bf16.msra.mxu0 0
    %187 = vmatprep.subr.bf16.mxu0 0
    %188 = vmatpush1.bf16.msra.mxu0 0
    %189 = vmatprep.subr.bf16.mxu0 0
    %190 = vmatpush1.bf16.msra.mxu0 0
    %191 = vmatprep.subr.bf16.mxu0 0
    %192 = vmatpush1.bf16.msra.mxu0 0
    %193 = vmatprep.subr.bf16.mxu0 0
    %194 = vmatpush1.bf16.msra.mxu0 0
    %195 = vmatprep.subr.bf16.mxu0 0
    %196 = vmatpush1.bf16.msra.mxu0 0
    %197 = vmatprep.mubr.bf16.mxu0 0
    %198 = vmatmul.mubr.bf16.gmra.mrb[0].mxu0 %v112
    %v199 = vpop.f32.mrb[0].mxu0
    %v200 = vadd.f32 %v66, %v199
    %v201 = vpop.f32.mrb[0].mxu0
    %v202 = vpop.f32.mrb[0].mxu0
    %v203 = vpop.f32.mrb[0].mxu0
    %204 = vdwg.mxu0
    %205 = vmax.xlane.f32.xlu0 %v200
    %v206 = vpop.xlane.xlu0 %205
    %v207 = vsub.f32 %v200, %v206
    %v208 = vmul.f32 %v207, 1.442695
    %v209 = vpow.pop %v208
    %210 = vadd.xlane.f32.xlu0 %v209
    %v211 = vpop.xlane.xlu0 %210
    %v212 = vlog2.pop %v211
    %v213 = vmul.f32 %v212, 0.6931472
    %v214 = vsub.f32 %v207, %v213
    %216 = vset.pattern.permute.xlu0 0
    %217 = vperm.xlu0 %216, %v214
    %v218 = vpop.permute.xlu0 %217
    %v220 = vmul.f32 %v159, %v218
    %221 = vset.pattern.permute.xlu0 1
    %222 = vperm.xlu0 %221, %v214
    %v223 = vpop.permute.xlu0 %222
    %v225 = vmul.f32 %v161, %v223
    %v226 = vadd.f32 %v220, %v225
    %227 = vst [vmem:[#allocation7] sm:$0xff] %v226
    // Predicated region
    $region22: #{tpu_custom_call.1} parent=1 // pred_check
      _
    $region23: #{tpu_custom_call.1} parent=1 // pred_check_branch
      %229 = sbr.rel (0) target = $region25
    $region24: #{tpu_custom_call.1} parent=1 // pred_region
      %s231 = ssub.s32 128, 128
      %232 = vsyncadd [#allocation4], %s231
      %s234 = sshll.u32 [#allocation7], 4
      %s235 = int_to_ptr.vmem [resolvable:$true] %s234
      %237 = dma.vmem_to_hbm [thread:$0]  %s235, 128, %s3, [#allocation4]
    $region25: #{tpu_custom_call.1} parent=1 // pred_fallthru
      _
    // Predicated region
    $region26: #{tpu_custom_call.1} parent=1 // pred_check
      _
    $region27: #{tpu_custom_call.1} parent=1 // pred_check_branch
      %239 = sbr.rel (0) target = $region29
    $region28: #{tpu_custom_call.1} parent=1 // pred_region
      %240 = dma.done [#allocation4], 128
    $region29: #{tpu_custom_call.1} parent=1 // pred_fallthru
      _
    %241 = vsyncpa [#allocation3], 1
    %242 = vsyncpa [#allocation6], 1
    %243 = vsyncpa [#allocation4], 1

</llo_original>
